<compile_context>
chip_gen: v7x
topology: tpu7x:2x2x1
jax: 0.10.0
libtpu: 0.0.40
codegen_flags: <defaults>
</compile_context>

<pallas_src>
import functools

import numpy as np
import jax
import jax.numpy as jnp
from jax.experimental import pallas as pl
from jax.experimental.pallas import tpu as pltpu

_EPS = 1e-12          # torch F.normalize default eps
_EPS2 = _EPS * _EPS   # clamp on the squared norm (== clamping the norm itself)


def _loss_kernel(f_ref, out_ref, *, num_patch, batch, inv_temp):
    """Whole-problem kernel: features (N*B, D) resident in VMEM -> scalar loss."""
    nb, _ = f_ref.shape
    n, b = num_patch, batch

    f = f_ref[...]                                            # (N*B, D) f32

    # z_avg = mean over the N patch views: strided row-block sum, unrolled
    # (N is small and static); all reads hit the already-resident VMEM block.
    acc = f_ref[pl.ds(0, b), :]
    for p in range(1, n):
        acc = acc + f_ref[pl.ds(p * b, b), :]
    z_avg = acc * (1.0 / n)                                   # (B, D)

    # Row L2-normalization via rsqrt (EUP); max-clamp on the squared norm is
    # mathematically identical to torch's x / max(||x||, eps).
    f_n = f * jax.lax.rsqrt(
        jnp.maximum(jnp.sum(f * f, axis=-1, keepdims=True), _EPS2))
    a_n = z_avg * jax.lax.rsqrt(
        jnp.maximum(jnp.sum(z_avg * z_avg, axis=-1, keepdims=True), _EPS2))

    # Similarity logits on the MXU: (N*B, D) x (B, D)^T -> (N*B, B), / temp.
    s = jax.lax.dot_general(
        f_n, a_n,
        dimension_numbers=(((1,), (1,)), ((), ())),
        preferred_element_type=jnp.float32) * inv_temp        # (N*B, B)

    # Positive logit of row r is column (r % B): iota "diagonal" mask (no gather).
    row_b = jax.lax.broadcasted_iota(jnp.int32, s.shape, 0) % b
    col = jax.lax.broadcasted_iota(jnp.int32, s.shape, 1)
    pos = jnp.sum(jnp.where(row_b == col, s, 0.0),
                  axis=-1, keepdims=True)                     # (N*B, 1)

    # Cross-entropy with target class 0 == logsumexp(row) - positive.
    m = jnp.max(s, axis=-1, keepdims=True)
    lse = m + jnp.log(jnp.sum(jnp.exp(s - m), axis=-1, keepdims=True))

    per_row = lse - pos                                       # (N*B, 1)

    # Single final reduction -> scalar output block.
    out_ref[...] = jnp.sum(per_row, axis=0, keepdims=True) * (1.0 / nb)


def multicrop_contrastive_loss_v2(features, temp):
    """JAX/Pallas equivalent of MultiCropContrastive_Loss_v2.forward.

    features: sequence of N arrays of shape (B, D).
    Returns the scalar loss (f32).
    """
    z_all = jnp.stack(list(features), axis=0).astype(jnp.float32)  # (N, B, D)
    n, b, d = map(int, z_all.shape)
    f_flat = z_all.reshape(n * b, d)        # == torch.cat(features, dim=0)

    kernel = functools.partial(
        _loss_kernel, num_patch=n, batch=b, inv_temp=1.0 / float(temp))

    out = pl.pallas_call(
        kernel,
        out_shape=jax.ShapeDtypeStruct((1, 1), jnp.float32),
        grid=(1,),
        # Full-extent blocks (block shape == array shape), so the (8,128)
        # divisibility rule does not apply; everything lives in VMEM.
        in_specs=[pl.BlockSpec((n * b, d), lambda i: (0, 0))],
        out_specs=pl.BlockSpec((1, 1), lambda i: (0, 0)),
        compiler_params=pltpu.CompilerParams(
            dimension_semantics=("arbitrary",)),
    )(f_flat)
    return out[0, 0]


def _reference(features, temp):
    """Pure-JAX reference mirroring the torch module (highest matmul precision)."""
    z_all = jnp.stack(list(features), axis=0).astype(jnp.float32)
    n, b, d = z_all.shape
    z_avg = z_all.mean(axis=0)
    feats = z_all.reshape(n * b, d)
    feats = feats / jnp.maximum(
        jnp.sqrt(jnp.sum(feats * feats, axis=1, keepdims=True)), _EPS)
    z_avg = z_avg / jnp.maximum(
        jnp.sqrt(jnp.sum(z_avg * z_avg, axis=1, keepdims=True)), _EPS)
    sim = jnp.einsum("rd,kd->rk", feats, z_avg,
                     precision=jax.lax.Precision.HIGHEST)
    logits = sim / temp
    pos = logits[jnp.arange(n * b), jnp.arange(n * b) % b]
    m = jnp.max(logits, axis=1)
    lse = m + jnp.log(jnp.sum(jnp.exp(logits - m[:, None]), axis=1))
    return jnp.mean(lse - pos)


if __name__ == "__main__":
    num_patch, batch, dim = 10, 8, 32
    temp = 0.5

    key = jax.random.PRNGKey(0)
    keys = jax.random.split(key, num_patch)
    features = [jax.random.normal(k, (batch, dim), dtype=jnp.float32)
                for k in keys]

    loss = multicrop_contrastive_loss_v2(features, temp)
    loss = jax.block_until_ready(loss)

    ref = _reference(features, temp)
    ref = jax.block_until_ready(ref)

    # Tolerance accommodates MXU f32 matmul pass-count differences vs the
    # highest-precision XLA reference; well below any semantic error scale.
    assert np.allclose(np.asarray(loss), np.asarray(ref), atol=5e-3), (loss, ref)

    print("KERNEL_OK")
</pallas_src>

<mosaic_0001>
module attributes {stable_mosaic.version = 11 : i64} {
  func.func @_loss_kernel(%arg0: i32, %arg1: memref<80x32xf32, #tpu.memory_space<vmem>>, %arg2: memref<1x1xf32, #tpu.memory_space<vmem>>) attributes {dimension_semantics = [#tpu.dimension_semantics<arbitrary>], iteration_bounds = array<i64: 1>, scalar_prefetch = 0 : i64, scratch_operands = 0 : i64, tpu.core_type = #tpu.core_type<tc>, window_params = [{pipeline_mode = #tpu.pipeline_mode<synchronous>, transform_indices = @transform_0, window_bounds = array<i64: 80, 32>}, {pipeline_mode = #tpu.pipeline_mode<synchronous>, transform_indices = @transform_1, window_bounds = array<i64: 1, 1>}]} {
    %c0 = arith.constant 0 : index
    %c0_0 = arith.constant 0 : index
    %0 = vector.load %arg1[%c0, %c0_0] : memref<80x32xf32, #tpu.memory_space<vmem>>, vector<80x32xf32>
    %c0_1 = arith.constant 0 : index
    %c0_2 = arith.constant 0 : index
    %1 = vector.load %arg1[%c0_1, %c0_2] : memref<80x32xf32, #tpu.memory_space<vmem>>, vector<8x32xf32>
    %c8 = arith.constant 8 : index
    %c0_3 = arith.constant 0 : index
    %2 = vector.load %arg1[%c8, %c0_3] : memref<80x32xf32, #tpu.memory_space<vmem>>, vector<8x32xf32>
    %3 = arith.addf %1, %2 : vector<8x32xf32>
    %c16 = arith.constant 16 : index
    %c0_4 = arith.constant 0 : index
    %4 = vector.load %arg1[%c16, %c0_4] : memref<80x32xf32, #tpu.memory_space<vmem>>, vector<8x32xf32>
    %5 = arith.addf %3, %4 : vector<8x32xf32>
    %c24 = arith.constant 24 : index
    %c0_5 = arith.constant 0 : index
    %6 = vector.load %arg1[%c24, %c0_5] : memref<80x32xf32, #tpu.memory_space<vmem>>, vector<8x32xf32>
    %7 = arith.addf %5, %6 : vector<8x32xf32>
    %c32 = arith.constant 32 : index
    %c0_6 = arith.constant 0 : index
    %8 = vector.load %arg1[%c32, %c0_6] : memref<80x32xf32, #tpu.memory_space<vmem>>, vector<8x32xf32>
    %9 = arith.addf %7, %8 : vector<8x32xf32>
    %c40 = arith.constant 40 : index
    %c0_7 = arith.constant 0 : index
    %10 = vector.load %arg1[%c40, %c0_7] : memref<80x32xf32, #tpu.memory_space<vmem>>, vector<8x32xf32>
    %11 = arith.addf %9, %10 : vector<8x32xf32>
    %c48 = arith.constant 48 : index
    %c0_8 = arith.constant 0 : index
    %12 = vector.load %arg1[%c48, %c0_8] : memref<80x32xf32, #tpu.memory_space<vmem>>, vector<8x32xf32>
    %13 = arith.addf %11, %12 : vector<8x32xf32>
    %c56 = arith.constant 56 : index
    %c0_9 = arith.constant 0 : index
    %14 = vector.load %arg1[%c56, %c0_9] : memref<80x32xf32, #tpu.memory_space<vmem>>, vector<8x32xf32>
    %15 = arith.addf %13, %14 : vector<8x32xf32>
    %c64 = arith.constant 64 : index
    %c0_10 = arith.constant 0 : index
    %16 = vector.load %arg1[%c64, %c0_10] : memref<80x32xf32, #tpu.memory_space<vmem>>, vector<8x32xf32>
    %17 = arith.addf %15, %16 : vector<8x32xf32>
    %c72 = arith.constant 72 : index
    %c0_11 = arith.constant 0 : index
    %18 = vector.load %arg1[%c72, %c0_11] : memref<80x32xf32, #tpu.memory_space<vmem>>, vector<8x32xf32>
    %19 = arith.addf %17, %18 : vector<8x32xf32>
    %cst = arith.constant 1.000000e-01 : f32
    %20 = vector.broadcast %cst : f32 to vector<8x32xf32>
    %21 = arith.mulf %19, %20 : vector<8x32xf32>
    %22 = arith.mulf %0, %0 : vector<80x32xf32>
    %cst_12 = arith.constant dense<0.000000e+00> : vector<80xf32>
    %23 = vector.multi_reduction <add>, %22, %cst_12 [1] : vector<80x32xf32> to vector<80xf32>
    %24 = vector.shape_cast %23 : vector<80xf32> to vector<80x1xf32>
    %cst_13 = arith.constant 1.000000e-24 : f32
    %25 = vector.broadcast %cst_13 : f32 to vector<80x1xf32>
    %26 = arith.maximumf %24, %25 : vector<80x1xf32>
    %27 = math.rsqrt %26 : vector<80x1xf32>
    %28 = vector.broadcast %27 : vector<80x1xf32> to vector<80x32xf32>
    %29 = arith.mulf %0, %28 : vector<80x32xf32>
    %30 = arith.mulf %21, %21 : vector<8x32xf32>
    %cst_14 = arith.constant dense<0.000000e+00> : vector<8xf32>
    %31 = vector.multi_reduction <add>, %30, %cst_14 [1] : vector<8x32xf32> to vector<8xf32>
    %32 = vector.shape_cast %31 : vector<8xf32> to vector<8x1xf32>
    %cst_15 = arith.constant 1.000000e-24 : f32
    %33 = vector.broadcast %cst_15 : f32 to vector<8x1xf32>
    %34 = arith.maximumf %32, %33 : vector<8x1xf32>
    %35 = math.rsqrt %34 : vector<8x1xf32>
    %36 = vector.broadcast %35 : vector<8x1xf32> to vector<8x32xf32>
    %37 = arith.mulf %21, %36 : vector<8x32xf32>
    %cst_16 = arith.constant dense<0.000000e+00> : vector<80x8xf32>
    %38 = tpu.matmul %29, %37, %cst_16 {dimension_numbers = #tpu.dot_dimension_numbers<[1], [1], [0], [0], [0, 0, 1, 0], [], []>} : vector<80x32xf32>, vector<8x32xf32>, vector<80x8xf32> -> vector<80x8xf32>
    %cst_17 = arith.constant 2.000000e+00 : f32
    %39 = vector.broadcast %cst_17 : f32 to vector<80x8xf32>
    %40 = arith.mulf %38, %39 : vector<80x8xf32>
    %41 = tpu.iota {dimensions = array<i32: 0>} : vector<80x8xi32>
    %c8_i32 = arith.constant 8 : i32
    %c0_i32 = arith.constant 0 : i32
    %42 = arith.cmpi eq, %c8_i32, %c0_i32 : i32
    %c1_i32 = arith.constant 1 : i32
    %43 = arith.select %42, %c1_i32, %c8_i32 : i32
    %44 = vector.broadcast %43 : i32 to vector<80x8xi32>
    %45 = arith.remsi %41, %44 : vector<80x8xi32>
    %c0_i32_18 = arith.constant 0 : i32
    %46 = vector.broadcast %c0_i32_18 : i32 to vector<80x8xi32>
    %47 = arith.cmpi ne, %45, %46 : vector<80x8xi32>
    %c0_i32_19 = arith.constant 0 : i32
    %48 = vector.broadcast %c0_i32_19 : i32 to vector<80x8xi32>
    %49 = arith.cmpi slt, %45, %48 : vector<80x8xi32>
    %c0_i32_20 = arith.constant 0 : i32
    %50 = arith.cmpi slt, %43, %c0_i32_20 : i32
    %51 = vector.broadcast %50 : i1 to vector<80x8xi1>
    %52 = vector.broadcast %51 : vector<80x8xi1> to vector<80x8xi1>
    %53 = arith.xori %49, %52 : vector<80x8xi1>
    %54 = arith.andi %53, %47 : vector<80x8xi1>
    %55 = vector.broadcast %43 : i32 to vector<80x8xi32>
    %56 = arith.addi %45, %55 : vector<80x8xi32>
    %57 = arith.select %54, %56, %45 : vector<80x8xi1>, vector<80x8xi32>
    %58 = tpu.iota {dimensions = array<i32: 1>} : vector<80x8xi32>
    %59 = arith.cmpi eq, %57, %58 : vector<80x8xi32>
    %cst_21 = arith.constant 0.000000e+00 : f32
    %60 = vector.broadcast %cst_21 : f32 to vector<80x8xf32>
    %61 = arith.select %59, %40, %60 : vector<80x8xi1>, vector<80x8xf32>
    %cst_22 = arith.constant dense<0.000000e+00> : vector<80xf32>
    %62 = vector.multi_reduction <add>, %61, %cst_22 [1] : vector<80x8xf32> to vector<80xf32>
    %63 = vector.shape_cast %62 : vector<80xf32> to vector<80x1xf32>
    %cst_23 = arith.constant dense<0xFF800000> : vector<80xf32>
    %64 = vector.multi_reduction <maximumf>, %40, %cst_23 [1] : vector<80x8xf32> to vector<80xf32>
    %65 = vector.shape_cast %64 : vector<80xf32> to vector<80x1xf32>
    %66 = vector.broadcast %65 : vector<80x1xf32> to vector<80x8xf32>
    %67 = arith.subf %40, %66 : vector<80x8xf32>
    %68 = math.exp %67 : vector<80x8xf32>
    %cst_24 = arith.constant dense<0.000000e+00> : vector<80xf32>
    %69 = vector.multi_reduction <add>, %68, %cst_24 [1] : vector<80x8xf32> to vector<80xf32>
    %70 = vector.shape_cast %69 : vector<80xf32> to vector<80x1xf32>
    %71 = math.log %70 : vector<80x1xf32>
    %72 = arith.addf %65, %71 : vector<80x1xf32>
    %73 = arith.subf %72, %63 : vector<80x1xf32>
    %cst_25 = arith.constant dense<0.000000e+00> : vector<1xf32>
    %74 = vector.multi_reduction <add>, %73, %cst_25 [0] : vector<80x1xf32> to vector<1xf32>
    %75 = vector.shape_cast %74 : vector<1xf32> to vector<1x1xf32>
    %cst_26 = arith.constant 1.250000e-02 : f32
    %76 = vector.broadcast %cst_26 : f32 to vector<1x1xf32>
    %77 = arith.mulf %75, %76 : vector<1x1xf32>
    %c0_27 = arith.constant 0 : index
    %c0_28 = arith.constant 0 : index
    %78 = vector.load %arg2[%c0_27, %c0_28] : memref<1x1xf32, #tpu.memory_space<vmem>>, vector<1x1xf32>
    tpu.vector_store %arg2[%c0_27, %c0_28], %77 {strides = array<i32>} : memref<1x1xf32, #tpu.memory_space<vmem>>, vector<1x1xf32>,
    return
  }
  func.func @transform_0(%arg0: i32) -> (i32, i32) {
    %c0_i32 = arith.constant 0 : i32
    %c0_i32_0 = arith.constant 0 : i32
    %c0_i32_1 = arith.constant 0 : i32
    return %c0_i32, %c0_i32_0 : i32, i32
  }
  func.func @transform_1(%arg0: i32) -> (i32, i32) {
    %c0_i32 = arith.constant 0 : i32
    %c0_i32_0 = arith.constant 0 : i32
    %c0_i32_1 = arith.constant 0 : i32
    return %c0_i32, %c0_i32_0 : i32, i32
  }
}

</mosaic_0001>

<llo_original>
// kernel: tpu_custom_call.1
$region0: #{tpu_custom_call.1}
  #allocation0 [shape = 'u32[]', space=smem, size = 0x4, offset = 0x4, fixed_abs, tag = 'smem constant byte address 0x4 - core index']
  #allocation1 [shape = 'u32[144,128]{1,0:T(1,128)}', space=vmem, size = 0x12000, scoped, tag = 'internal scratch']
  %s0 = inlined_call_operand.vmem [shape: f32[80,32], index: 0, kind: input, shape index: {}]
  %s1 = inlined_call_operand.hbm [shape: f32[1,1], index: 1, kind: output, shape index: {}]
  %s2 = sld [smem:[#allocation0]]
  $region14: #{tpu_custom_call.1} parent=0
    _
  %s4 = ssub.s32 1, %s2
  %s5 = scalar_select 0, %s4, %s2
  $region1: #{tpu_custom_call.1} parent=0
    #allocation2 [shape = 'u8[512]{0}', space=vmem, size = 0x400, scoped, tag = 'output window, operand 0, single buffered']
    #allocation3 [shape = 's32[1]{0}', space=sflag, size = 0x4, scoped, tag = 'scoped memory for tpu_custom_call.1']
    %6 = vsyncpa [#allocation3], 0
    // Predicated region
    $region2: #{tpu_custom_call.1} parent=1 // pred_check
      _
    $region3: #{tpu_custom_call.1} parent=1 // pred_check_branch
      %8 = sbr.rel (0) target = $region5
    $region4: #{tpu_custom_call.1} parent=1 // pred_region
      _
    $region5: #{tpu_custom_call.1} parent=1 // pred_fallthru
      _
    %v9 = vld [vmem:[%s0] sm:$0xff]
    %v10 = vld [vmem:[%s0 + $0x8] sm:$0xff]
    %v11 = vld [vmem:[%s0 + $0x10] sm:$0xff]
    %v12 = vld [vmem:[%s0 + $0x18] sm:$0xff]
    %v13 = vld [vmem:[%s0 + $0x20] sm:$0xff]
    %v14 = vld [vmem:[%s0 + $0x28] sm:$0xff]
    %v15 = vld [vmem:[%s0 + $0x30] sm:$0xff]
    %v16 = vld [vmem:[%s0 + $0x38] sm:$0xff]
    %v17 = vld [vmem:[%s0 + $0x40] sm:$0xff]
    %v18 = vld [vmem:[%s0 + $0x48] sm:$0xff]
    %v19 = vadd.f32 %v9, %v10
    %v20 = vadd.f32 %v19, %v11
    %v21 = vadd.f32 %v20, %v12
    %v22 = vadd.f32 %v21, %v13
    %v23 = vadd.f32 %v22, %v14
    %v24 = vadd.f32 %v23, %v15
    %v25 = vadd.f32 %v24, %v16
    %v26 = vadd.f32 %v25, %v17
    %v27 = vadd.f32 %v26, %v18
    %v28 = vmul.f32 %v27, 0.1
    %v29 = vmul.f32 %v9, %v9
    %v30 = vmul.f32 %v10, %v10
    %v31 = vmul.f32 %v11, %v11
    %v32 = vmul.f32 %v12, %v12
    %v33 = vmul.f32 %v13, %v13
    %v34 = vmul.f32 %v14, %v14
    %v35 = vmul.f32 %v15, %v15
    %v36 = vmul.f32 %v16, %v16
    %v37 = vmul.f32 %v17, %v17
    %v38 = vmul.f32 %v18, %v18
    %vm39 = vcmask 261120
    %v40 = vsel %vm39, %v29, 0.0
    %41 = vadd.xlane.f32.xlu0 %v40
    %v42 = vpop.xlane.xlu0 %41
    %v43 = vsel %vm39, %v30, 0.0
    %44 = vadd.xlane.f32.xlu0 %v43
    %v45 = vpop.xlane.xlu0 %44
    %v46 = vsel %vm39, %v31, 0.0
    %47 = vadd.xlane.f32.xlu0 %v46
    %v48 = vpop.xlane.xlu0 %47
    %v49 = vsel %vm39, %v32, 0.0
    %50 = vadd.xlane.f32.xlu0 %v49
    %v51 = vpop.xlane.xlu0 %50
    %v52 = vsel %vm39, %v33, 0.0
    %53 = vadd.xlane.f32.xlu0 %v52
    %v54 = vpop.xlane.xlu0 %53
    %v55 = vsel %vm39, %v34, 0.0
    %56 = vadd.xlane.f32.xlu0 %v55
    %v57 = vpop.xlane.xlu0 %56
    %v58 = vsel %vm39, %v35, 0.0
    %59 = vadd.xlane.f32.xlu0 %v58
    %v60 = vpop.xlane.xlu0 %59
    %v61 = vsel %vm39, %v36, 0.0
    %62 = vadd.xlane.f32.xlu0 %v61
    %v63 = vpop.xlane.xlu0 %62
    %v64 = vsel %vm39, %v37, 0.0
    %65 = vadd.xlane.f32.xlu0 %v64
    %v66 = vpop.xlane.xlu0 %65
    %v67 = vsel %vm39, %v38, 0.0
    %68 = vadd.xlane.f32.xlu0 %v67
    %v69 = vpop.xlane.xlu0 %68
    %v70 = vmax.f32 %v42, 1e-24
    %v71 = vmax.f32 %v45, 1e-24
    %v72 = vmax.f32 %v48, 1e-24
    %v73 = vmax.f32 %v51, 1e-24
    %v74 = vmax.f32 %v54, 1e-24
    %v75 = vmax.f32 %v57, 1e-24
    %v76 = vmax.f32 %v60, 1e-24
    %v77 = vmax.f32 %v63, 1e-24
    %v78 = vmax.f32 %v66, 1e-24
    %v79 = vmax.f32 %v69, 1e-24
    %v80 = vrsqrt.pop %v70
    %v81 = vrsqrt.pop %v71
    %v82 = vrsqrt.pop %v72
    %v83 = vrsqrt.pop %v73
    %v84 = vrsqrt.pop %v74
    %v85 = vrsqrt.pop %v75
    %v86 = vrsqrt.pop %v76
    %v87 = vrsqrt.pop %v77
    %v88 = vrsqrt.pop %v78
    %v89 = vrsqrt.pop %v79
    %v90 = vmul.f32 %v9, %v80
    %v91 = vmul.f32 %v10, %v81
    %v92 = vmul.f32 %v11, %v82
    %v93 = vmul.f32 %v12, %v83
    %v94 = vmul.f32 %v13, %v84
    %v95 = vmul.f32 %v14, %v85
    %v96 = vmul.f32 %v15, %v86
    %v97 = vmul.f32 %v16, %v87
    %v98 = vmul.f32 %v17, %v88
    %v99 = vmul.f32 %v18, %v89
    %v100 = vmul.f32 %v28, %v28
    %v101 = vsel %vm39, %v100, 0.0
    %102 = vadd.xlane.f32.xlu0 %v101
    %v103 = vpop.xlane.xlu0 %102
    %v104 = vmax.f32 %v103, 1e-24
    %v105 = vrsqrt.pop %v104
    %v106 = vmul.f32 %v28, %v105
    %v108 = vsel %vm39, %v90, 0
    %v111 = vsel %vm39, %v91, 0
    %v114 = vsel %vm39, %v92, 0
    %v117 = vsel %vm39, %v93, 0
    %v120 = vsel %vm39, %v94, 0
    %v123 = vsel %vm39, %v95, 0
    %v126 = vsel %vm39, %v96, 0
    %v129 = vsel %vm39, %v97, 0
    %v132 = vsel %vm39, %v98, 0
    %v135 = vsel %vm39, %v99, 0
    %v138 = vsel %vm39, %v106, 0
    %140 = vmatprep.subr.mxu0 0.0
    %141 = vmatpush1.xpose.msra.mxu0 %v138
    %142 = vmatprep.subr.mxu0 0.0
    %143 = vmatpush1.xpose.msra.mxu0 0.0
    %144 = vmatprep.subr.mxu0 0.0
    %145 = vmatpush1.xpose.msra.mxu0 0.0
    %146 = vmatprep.subr.mxu0 0.0
    %147 = vmatpush1.xpose.msra.mxu0 0.0
    %148 = vmatprep.subr.mxu0 0.0
    %149 = vmatpush1.xpose.msra.mxu0 0.0
    %150 = vmatprep.subr.mxu0 0.0
    %151 = vmatpush1.xpose.msra.mxu0 0.0
    %152 = vmatprep.subr.mxu0 0.0
    %153 = vmatpush1.xpose.msra.mxu0 0.0
    %154 = vmatprep.subr.mxu0 0.0
    %155 = vmatpush1.xpose.msra.mxu0 0.0
    %156 = vmatprep.subr.mxu0 0.0
    %157 = vmatpush1.xpose.msra.mxu0 0.0
    %158 = vmatprep.subr.mxu0 0.0
    %159 = vmatpush1.xpose.msra.mxu0 0.0
    %160 = vmatprep.subr.mxu0 0.0
    %161 = vmatpush1.xpose.msra.mxu0 0.0
    %162 = vmatprep.subr.mxu0 0.0
    %163 = vmatpush1.xpose.msra.mxu0 0.0
    %164 = vmatprep.subr.mxu0 0.0
    %165 = vmatpush1.xpose.msra.mxu0 0.0
    %166 = vmatprep.subr.mxu0 0.0
    %167 = vmatpush1.xpose.msra.mxu0 0.0
    %168 = vmatprep.subr.mxu0 0.0
    %169 = vmatpush1.xpose.msra.mxu0 0.0
    %170 = vmatprep.subr.mxu0 0.0
    %171 = vmatpush1.xpose.msra.mxu0 0.0
    %172 = vmatprep.subr.mxu0 0.0
    %173 = vmatpush1.xpose.msra.mxu0 0.0
    %174 = vmatprep.subr.mxu0 0.0
    %175 = vmatpush1.xpose.msra.mxu0 0.0
    %176 = vmatprep.subr.mxu0 0.0
    %177 = vmatpush1.xpose.msra.mxu0 0.0
    %178 = vmatprep.subr.mxu0 0.0
    %179 = vmatpush1.xpose.msra.mxu0 0.0
    %180 = vmatprep.subr.mxu0 0.0
    %181 = vmatpush1.xpose.msra.mxu0 0.0
    %182 = vmatprep.subr.mxu0 0.0
    %183 = vmatpush1.xpose.msra.mxu0 0.0
    %184 = vmatprep.subr.mxu0 0.0
    %185 = vmatpush1.xpose.msra.mxu0 0.0
    %186 = vmatprep.subr.mxu0 0.0
    %187 = vmatpush1.xpose.msra.mxu0 0.0
    %188 = vmatprep.subr.mxu0 0.0
    %189 = vmatpush1.xpose.msra.mxu0 0.0
    %190 = vmatprep.subr.mxu0 0.0
    %191 = vmatpush1.xpose.msra.mxu0 0.0
    %192 = vmatprep.subr.mxu0 0.0
    %193 = vmatpush1.xpose.msra.mxu0 0.0
    %194 = vmatprep.subr.mxu0 0.0
    %195 = vmatpush1.xpose.msra.mxu0 0.0
    %196 = vmatprep.subr.mxu0 0.0
    %197 = vmatpush1.xpose.msra.mxu0 0.0
    %198 = vmatprep.subr.mxu0 0.0
    %199 = vmatpush1.xpose.msra.mxu0 0.0
    %200 = vmatprep.subr.mxu0 0.0
    %201 = vmatpush1.xpose.msra.mxu0 0.0
    %202 = vmatprep.subr.mxu0 0.0
    %203 = vmatpush1.xpose.msra.mxu0 0.0
    %204 = vmatprep.mubr.f32.mxu0 0.0
    %205 = vmatmul.mubr.f32.gmra.mrb[0].mxu0 %v108
    %v206 = vpop.f32.mrb[0].mxu0
    %v207 = vadd.f32 0.0, %v206
    %v208 = vpop.f32.mrb[0].mxu0
    %209 = vmatprep.mubr.f32.mxu0 0.0
    %210 = vmatmul.mubr.f32.gmra.mrb[0].mxu0 %v111
    %v211 = vpop.f32.mrb[0].mxu0
    %v212 = vadd.f32 0.0, %v211
    %v213 = vpop.f32.mrb[0].mxu0
    %214 = vmatprep.mubr.f32.mxu0 0.0
    %215 = vmatmul.mubr.f32.gmra.mrb[0].mxu0 %v114
    %v216 = vpop.f32.mrb[0].mxu0
    %v217 = vadd.f32 0.0, %v216
    %v218 = vpop.f32.mrb[0].mxu0
    %219 = vmatprep.mubr.f32.mxu0 0.0
    %220 = vmatmul.mubr.f32.gmra.mrb[0].mxu0 %v117
    %v221 = vpop.f32.mrb[0].mxu0
    %v222 = vadd.f32 0.0, %v221
    %v223 = vpop.f32.mrb[0].mxu0
    %224 = vmatprep.mubr.f32.mxu0 0.0
    %225 = vmatmul.mubr.f32.gmra.mrb[0].mxu0 %v120
    %v226 = vpop.f32.mrb[0].mxu0
    %v227 = vadd.f32 0.0, %v226
    %v228 = vpop.f32.mrb[0].mxu0
    %229 = vmatprep.mubr.f32.mxu0 0.0
    %230 = vmatmul.mubr.f32.gmra.mrb[0].mxu0 %v123
    %v231 = vpop.f32.mrb[0].mxu0
    %v232 = vadd.f32 0.0, %v231
    %v233 = vpop.f32.mrb[0].mxu0
    %234 = vmatprep.mubr.f32.mxu0 0.0
    %235 = vmatmul.mubr.f32.gmra.mrb[0].mxu0 %v126
    %v236 = vpop.f32.mrb[0].mxu0
    %v237 = vadd.f32 0.0, %v236
    %v238 = vpop.f32.mrb[0].mxu0
    %239 = vmatprep.mubr.f32.mxu0 0.0
    %240 = vmatmul.mubr.f32.gmra.mrb[0].mxu0 %v129
    %v241 = vpop.f32.mrb[0].mxu0
    %v242 = vadd.f32 0.0, %v241
    %v243 = vpop.f32.mrb[0].mxu0
    %244 = vmatprep.mubr.f32.mxu0 0.0
    %245 = vmatmul.mubr.f32.gmra.mrb[0].mxu0 %v132
    %v246 = vpop.f32.mrb[0].mxu0
    %v247 = vadd.f32 0.0, %v246
    %v248 = vpop.f32.mrb[0].mxu0
    %249 = vmatprep.mubr.f32.mxu0 0.0
    %250 = vmatmul.mubr.f32.gmra.mrb[0].mxu0 %v135
    %v251 = vpop.f32.mrb[0].mxu0
    %v252 = vadd.f32 0.0, %v251
    %v253 = vpop.f32.mrb[0].mxu0
    %254 = vdwg.mxu0
    %v255 = vmul.f32 %v207, 2.0
    %v256 = vmul.f32 %v212, 2.0
    %v257 = vmul.f32 %v217, 2.0
    %v258 = vmul.f32 %v222, 2.0
    %v259 = vmul.f32 %v227, 2.0
    %v260 = vmul.f32 %v232, 2.0
    %v261 = vmul.f32 %v237, 2.0
    %v262 = vmul.f32 %v242, 2.0
    %v263 = vmul.f32 %v247, 2.0
    %v264 = vmul.f32 %v252, 2.0
    %v265 = vlaneseq
    %v266 = vshrl.u32 %v265, 7
    %v267 = vadd.s32 %v266, 8
    %v268 = vadd.s32 %v266, 16
    %v269 = vadd.s32 %v266, 24
    %v270 = vadd.s32 %v266, 32
    %v271 = vadd.s32 %v266, 40
    %v272 = vadd.s32 %v266, 48
    %v273 = vadd.s32 %v266, 56
    %v274 = vadd.s32 %v266, 64
    %v275 = vadd.s32 %v266, 72
    %vm276 = vcmp.lt.s32.totalorder %v266, 0
    %v277 = vsub.s32 0, %v266
    %v278 = vsel %vm276, %v277, %v266
    %v279 = vshrl.u32 %v278, 3
    %v280 = vand.u32 %v278, 7
    %v281 = vsub.s32 0, %v280
    %v282 = vsel %vm276, %v281, %v280
    %vm283 = vcmp.lt.s32.totalorder %v267, 0
    %v284 = vsub.s32 0, %v267
    %v285 = vsel %vm283, %v284, %v267
    %v286 = vshrl.u32 %v285, 3
    %v287 = vand.u32 %v285, 7
    %v288 = vsub.s32 0, %v287
    %v289 = vsel %vm283, %v288, %v287
    %vm290 = vcmp.lt.s32.totalorder %v268, 0
    %v291 = vsub.s32 0, %v268
    %v292 = vsel %vm290, %v291, %v268
    %v293 = vshrl.u32 %v292, 3
    %v294 = vand.u32 %v292, 7
    %v295 = vsub.s32 0, %v294
    %v296 = vsel %vm290, %v295, %v294
    %vm297 = vcmp.lt.s32.totalorder %v269, 0
    %v298 = vsub.s32 0, %v269
    %v299 = vsel %vm297, %v298, %v269
    %v300 = vshrl.u32 %v299, 3
    %v301 = vand.u32 %v299, 7
    %v302 = vsub.s32 0, %v301
    %v303 = vsel %vm297, %v302, %v301
    %vm304 = vcmp.lt.s32.totalorder %v270, 0
    %v305 = vsub.s32 0, %v270
    %v306 = vsel %vm304, %v305, %v270
    %v307 = vshrl.u32 %v306, 3
    %v308 = vand.u32 %v306, 7
    %v309 = vsub.s32 0, %v308
    %v310 = vsel %vm304, %v309, %v308
    %vm311 = vcmp.lt.s32.totalorder %v271, 0
    %v312 = vsub.s32 0, %v271
    %v313 = vsel %vm311, %v312, %v271
    %v314 = vshrl.u32 %v313, 3
    %v315 = vand.u32 %v313, 7
    %v316 = vsub.s32 0, %v315
    %v317 = vsel %vm311, %v316, %v315
    %vm318 = vcmp.lt.s32.totalorder %v272, 0
    %v319 = vsub.s32 0, %v272
    %v320 = vsel %vm318, %v319, %v272
    %v321 = vshrl.u32 %v320, 3
    %v322 = vand.u32 %v320, 7
    %v323 = vsub.s32 0, %v322
    %v324 = vsel %vm318, %v323, %v322
    %vm325 = vcmp.lt.s32.totalorder %v273, 0
    %v326 = vsub.s32 0, %v273
    %v327 = vsel %vm325, %v326, %v273
    %v328 = vshrl.u32 %v327, 3
    %v329 = vand.u32 %v327, 7
    %v330 = vsub.s32 0, %v329
    %v331 = vsel %vm325, %v330, %v329
    %vm332 = vcmp.lt.s32.totalorder %v274, 0
    %v333 = vsub.s32 0, %v274
    %v334 = vsel %vm332, %v333, %v274
    %v335 = vshrl.u32 %v334, 3
    %v336 = vand.u32 %v334, 7
    %v337 = vsub.s32 0, %v336
    %v338 = vsel %vm332, %v337, %v336
    %vm339 = vcmp.lt.s32.totalorder %v275, 0
    %v340 = vsub.s32 0, %v275
    %v341 = vsel %vm339, %v340, %v275
    %v342 = vshrl.u32 %v341, 3
    %v343 = vand.u32 %v341, 7
    %v344 = vsub.s32 0, %v343
    %v345 = vsel %vm339, %v344, %v343
    %vm346 = vcmp.ne.s32.totalorder %v282, 0
    %vm347 = vcmp.ne.s32.totalorder %v289, 0
    %vm348 = vcmp.ne.s32.totalorder %v296, 0
    %vm349 = vcmp.ne.s32.totalorder %v303, 0
    %vm350 = vcmp.ne.s32.totalorder %v310, 0
    %vm351 = vcmp.ne.s32.totalorder %v317, 0
    %vm352 = vcmp.ne.s32.totalorder %v324, 0
    %vm353 = vcmp.ne.s32.totalorder %v331, 0
    %vm354 = vcmp.ne.s32.totalorder %v338, 0
    %vm355 = vcmp.ne.s32.totalorder %v345, 0
    %vm356 = vcmp.lt.s32.totalorder %v282, 0
    %vm357 = vcmp.lt.s32.totalorder %v289, 0
    %vm358 = vcmp.lt.s32.totalorder %v296, 0
    %vm359 = vcmp.lt.s32.totalorder %v303, 0
    %vm360 = vcmp.lt.s32.totalorder %v310, 0
    %vm361 = vcmp.lt.s32.totalorder %v317, 0
    %vm362 = vcmp.lt.s32.totalorder %v324, 0
    %vm363 = vcmp.lt.s32.totalorder %v331, 0
    %vm364 = vcmp.lt.s32.totalorder %v338, 0
    %vm365 = vcmp.lt.s32.totalorder %v345, 0
    %vm366 = vmand %vm356, %vm346
    %vm367 = vmand %vm357, %vm347
    %vm368 = vmand %vm358, %vm348
    %vm369 = vmand %vm359, %vm349
    %vm370 = vmand %vm360, %vm350
    %vm371 = vmand %vm361, %vm351
    %vm372 = vmand %vm362, %vm352
    %vm373 = vmand %vm363, %vm353
    %vm374 = vmand %vm364, %vm354
    %vm375 = vmand %vm365, %vm355
    %v376 = vadd.s32 %v282, 8
    %v377 = vadd.s32 %v289, 8
    %v378 = vadd.s32 %v296, 8
    %v379 = vadd.s32 %v303, 8
    %v380 = vadd.s32 %v310, 8
    %v381 = vadd.s32 %v317, 8
    %v382 = vadd.s32 %v324, 8
    %v383 = vadd.s32 %v331, 8
    %v384 = vadd.s32 %v338, 8
    %v385 = vadd.s32 %v345, 8
    %v386 = vsel %vm366, %v376, %v282
    %v387 = vsel %vm367, %v377, %v289
    %v388 = vsel %vm368, %v378, %v296
    %v389 = vsel %vm369, %v379, %v303
    %v390 = vsel %vm370, %v380, %v310
    %v391 = vsel %vm371, %v381, %v317
    %v392 = vsel %vm372, %v382, %v324
    %v393 = vsel %vm373, %v383, %v331
    %v394 = vsel %vm374, %v384, %v338
    %v395 = vsel %vm375, %v385, %v345
    %v396 = vlaneseq
    %v397 = vand.u32 %v396, 127
    %vm398 = vcmp.eq.s32.totalorder %v386, %v397
    %vm399 = vcmp.eq.s32.totalorder %v387, %v397
    %vm400 = vcmp.eq.s32.totalorder %v388, %v397
    %vm401 = vcmp.eq.s32.totalorder %v389, %v397
    %vm402 = vcmp.eq.s32.totalorder %v390, %v397
    %vm403 = vcmp.eq.s32.totalorder %v391, %v397
    %vm404 = vcmp.eq.s32.totalorder %v392, %v397
    %vm405 = vcmp.eq.s32.totalorder %v393, %v397
    %vm406 = vcmp.eq.s32.totalorder %v394, %v397
    %vm407 = vcmp.eq.s32.totalorder %v395, %v397
    %v408 = vsel %vm398, %v255, 0.0
    %v409 = vsel %vm399, %v256, 0.0
    %v410 = vsel %vm400, %v257, 0.0
    %v411 = vsel %vm401, %v258, 0.0
    %v412 = vsel %vm402, %v259, 0.0
    %v413 = vsel %vm403, %v260, 0.0
    %v414 = vsel %vm404, %v261, 0.0
    %v415 = vsel %vm405, %v262, 0.0
    %v416 = vsel %vm406, %v263, 0.0
    %v417 = vsel %vm407, %v264, 0.0
    %vm418 = vcmask 64512
    %v419 = vsel %vm418, %v408, 0.0
    %420 = vadd.xlane.f32.xlu0 %v419
    %v421 = vpop.xlane.xlu0 %420
    %v422 = vsel %vm418, %v409, 0.0
    %423 = vadd.xlane.f32.xlu0 %v422
    %v424 = vpop.xlane.xlu0 %423
    %v425 = vsel %vm418, %v410, 0.0
    %426 = vadd.xlane.f32.xlu0 %v425
    %v427 = vpop.xlane.xlu0 %426
    %v428 = vsel %vm418, %v411, 0.0
    %429 = vadd.xlane.f32.xlu0 %v428
    %v430 = vpop.xlane.xlu0 %429
    %v431 = vsel %vm418, %v412, 0.0
    %432 = vadd.xlane.f32.xlu0 %v431
    %v433 = vpop.xlane.xlu0 %432
    %v434 = vsel %vm418, %v413, 0.0
    %435 = vadd.xlane.f32.xlu0 %v434
    %v436 = vpop.xlane.xlu0 %435
    %v437 = vsel %vm418, %v414, 0.0
    %438 = vadd.xlane.f32.xlu0 %v437
    %v439 = vpop.xlane.xlu0 %438
    %v440 = vsel %vm418, %v415, 0.0
    %441 = vadd.xlane.f32.xlu0 %v440
    %v442 = vpop.xlane.xlu0 %441
    %v443 = vsel %vm418, %v416, 0.0
    %444 = vadd.xlane.f32.xlu0 %v443
    %v445 = vpop.xlane.xlu0 %444
    %v446 = vsel %vm418, %v417, 0.0
    %447 = vadd.xlane.f32.xlu0 %v446
    %v448 = vpop.xlane.xlu0 %447
    %v449 = vsel %vm418, %v255, -inf
    %450 = vmax.xlane.f32.xlu0 %v449
    %v451 = vpop.xlane.xlu0 %450
    %v452 = vsel %vm418, %v256, -inf
    %453 = vmax.xlane.f32.xlu0 %v452
    %v454 = vpop.xlane.xlu0 %453
    %v455 = vsel %vm418, %v257, -inf
    %456 = vmax.xlane.f32.xlu0 %v455
    %v457 = vpop.xlane.xlu0 %456
    %v458 = vsel %vm418, %v258, -inf
    %459 = vmax.xlane.f32.xlu0 %v458
    %v460 = vpop.xlane.xlu0 %459
    %v461 = vsel %vm418, %v259, -inf
    %462 = vmax.xlane.f32.xlu0 %v461
    %v463 = vpop.xlane.xlu0 %462
    %v464 = vsel %vm418, %v260, -inf
    %465 = vmax.xlane.f32.xlu0 %v464
    %v466 = vpop.xlane.xlu0 %465
    %v467 = vsel %vm418, %v261, -inf
    %468 = vmax.xlane.f32.xlu0 %v467
    %v469 = vpop.xlane.xlu0 %468
    %v470 = vsel %vm418, %v262, -inf
    %471 = vmax.xlane.f32.xlu0 %v470
    %v472 = vpop.xlane.xlu0 %471
    %v473 = vsel %vm418, %v263, -inf
    %474 = vmax.xlane.f32.xlu0 %v473
    %v475 = vpop.xlane.xlu0 %474
    %v476 = vsel %vm418, %v264, -inf
    %477 = vmax.xlane.f32.xlu0 %v476
    %v478 = vpop.xlane.xlu0 %477
    %v479 = vsub.f32 %v255, %v451
    %v480 = vsub.f32 %v256, %v454
    %v481 = vsub.f32 %v257, %v457
    %v482 = vsub.f32 %v258, %v460
    %v483 = vsub.f32 %v259, %v463
    %v484 = vsub.f32 %v260, %v466
    %v485 = vsub.f32 %v261, %v469
    %v486 = vsub.f32 %v262, %v472
    %v487 = vsub.f32 %v263, %v475
    %v488 = vsub.f32 %v264, %v478
    %v489 = vmul.f32 %v479, 1.442695
    %v490 = vpow.pop %v489
    %v491 = vmul.f32 %v480, 1.442695
    %v492 = vpow.pop %v491
    %v493 = vmul.f32 %v481, 1.442695
    %v494 = vpow.pop %v493
    %v495 = vmul.f32 %v482, 1.442695
    %v496 = vpow.pop %v495
    %v497 = vmul.f32 %v483, 1.442695
    %v498 = vpow.pop %v497
    %v499 = vmul.f32 %v484, 1.442695
    %v500 = vpow.pop %v499
    %v501 = vmul.f32 %v485, 1.442695
    %v502 = vpow.pop %v501
    %v503 = vmul.f32 %v486, 1.442695
    %v504 = vpow.pop %v503
    %v505 = vmul.f32 %v487, 1.442695
    %v506 = vpow.pop %v505
    %v507 = vmul.f32 %v488, 1.442695
    %v508 = vpow.pop %v507
    %v509 = vsel %vm418, %v490, 0.0
    %510 = vadd.xlane.f32.xlu0 %v509
    %v511 = vpop.xlane.xlu0 %510
    %v512 = vsel %vm418, %v492, 0.0
    %513 = vadd.xlane.f32.xlu0 %v512
    %v514 = vpop.xlane.xlu0 %513
    %v515 = vsel %vm418, %v494, 0.0
    %516 = vadd.xlane.f32.xlu0 %v515
    %v517 = vpop.xlane.xlu0 %516
    %v518 = vsel %vm418, %v496, 0.0
    %519 = vadd.xlane.f32.xlu0 %v518
    %v520 = vpop.xlane.xlu0 %519
    %v521 = vsel %vm418, %v498, 0.0
    %522 = vadd.xlane.f32.xlu0 %v521
    %v523 = vpop.xlane.xlu0 %522
    %v524 = vsel %vm418, %v500, 0.0
    %525 = vadd.xlane.f32.xlu0 %v524
    %v526 = vpop.xlane.xlu0 %525
    %v527 = vsel %vm418, %v502, 0.0
    %528 = vadd.xlane.f32.xlu0 %v527
    %v529 = vpop.xlane.xlu0 %528
    %v530 = vsel %vm418, %v504, 0.0
    %531 = vadd.xlane.f32.xlu0 %v530
    %v532 = vpop.xlane.xlu0 %531
    %v533 = vsel %vm418, %v506, 0.0
    %534 = vadd.xlane.f32.xlu0 %v533
    %v535 = vpop.xlane.xlu0 %534
    %v536 = vsel %vm418, %v508, 0.0
    %537 = vadd.xlane.f32.xlu0 %v536
    %v538 = vpop.xlane.xlu0 %537
    %v539 = vlog2.pop %v511
    %v540 = vmul.f32 %v539, 0.6931472
    %v541 = vlog2.pop %v514
    %v542 = vmul.f32 %v541, 0.6931472
    %v543 = vlog2.pop %v517
    %v544 = vmul.f32 %v543, 0.6931472
    %v545 = vlog2.pop %v520
    %v546 = vmul.f32 %v545, 0.6931472
    %v547 = vlog2.pop %v523
    %v548 = vmul.f32 %v547, 0.6931472
    %v549 = vlog2.pop %v526
    %v550 = vmul.f32 %v549, 0.6931472
    %v551 = vlog2.pop %v529
    %v552 = vmul.f32 %v551, 0.6931472
    %v553 = vlog2.pop %v532
    %v554 = vmul.f32 %v553, 0.6931472
    %v555 = vlog2.pop %v535
    %v556 = vmul.f32 %v555, 0.6931472
    %v557 = vlog2.pop %v538
    %v558 = vmul.f32 %v557, 0.6931472
    %v559 = vadd.f32 %v451, %v540
    %v560 = vadd.f32 %v454, %v542
    %v561 = vadd.f32 %v457, %v544
    %v562 = vadd.f32 %v460, %v546
    %v563 = vadd.f32 %v463, %v548
    %v564 = vadd.f32 %v466, %v550
    %v565 = vadd.f32 %v469, %v552
    %v566 = vadd.f32 %v472, %v554
    %v567 = vadd.f32 %v475, %v556
    %v568 = vadd.f32 %v478, %v558
    %v569 = vsub.f32 %v559, %v421
    %v570 = vsub.f32 %v560, %v424
    %v571 = vsub.f32 %v561, %v427
    %v572 = vsub.f32 %v562, %v430
    %v573 = vsub.f32 %v563, %v433
    %v574 = vsub.f32 %v564, %v436
    %v575 = vsub.f32 %v565, %v439
    %v576 = vsub.f32 %v566, %v442
    %v577 = vsub.f32 %v567, %v445
    %v578 = vsub.f32 %v568, %v448
    %v579 = vadd.f32 %v569, %v570
    %v580 = vadd.f32 %v579, %v571
    %v581 = vadd.f32 %v580, %v572
    %v582 = vadd.f32 %v581, %v573
    %v583 = vadd.f32 %v582, %v574
    %v584 = vadd.f32 %v583, %v575
    %v585 = vadd.f32 %v584, %v576
    %v586 = vadd.f32 %v585, %v577
    %v587 = vadd.f32 %v586, %v578
    %v588 = vrot.slane %v587, 4
    %v589 = vadd.f32 %v587, %v588
    %v590 = vrot.slane %v589, 2
    %v591 = vadd.f32 %v589, %v590
    %v592 = vrot.slane %v591, 1
    %v593 = vadd.f32 %v591, %v592
    %v594 = vmul.f32 %v593, 0.0125
    %vm595 = vcmask 0
    %596 = vst.msk [vmem:[#allocation2] sm:$0x1] %vm595, %v594
    // Predicated region
    $region6: #{tpu_custom_call.1} parent=1 // pred_check
      _
    $region7: #{tpu_custom_call.1} parent=1 // pred_check_branch
      %598 = sbr.rel (0) target = $region9
    $region8: #{tpu_custom_call.1} parent=1 // pred_region
      %s600 = ssub.s32 16, 16
      %601 = vsyncadd [#allocation3], %s600
      %s603 = sshll.u32 [#allocation2], 4
      %s604 = int_to_ptr.vmem [resolvable:$true] %s603
      %606 = dma.vmem_to_hbm [thread:$0]  %s604, 16, %s1, [#allocation3]
    $region9: #{tpu_custom_call.1} parent=1 // pred_fallthru
      _
    // Predicated region
    $region10: #{tpu_custom_call.1} parent=1 // pred_check
      _
    $region11: #{tpu_custom_call.1} parent=1 // pred_check_branch
      %608 = sbr.rel (0) target = $region13
    $region12: #{tpu_custom_call.1} parent=1 // pred_region
      %609 = dma.done [#allocation3], 16
    $region13: #{tpu_custom_call.1} parent=1 // pred_fallthru
      _
    %610 = vsyncpa [#allocation3], 1

</llo_original>
